<compile_context>
chip_gen: v7x
topology: tpu7x:2x2x1
jax: 0.10.0
libtpu: 0.0.40
codegen_flags: <defaults>
</compile_context>

<pallas_src>
import jax
import jax.numpy as jnp
from jax import lax
from jax.experimental import pallas as pl
from jax.experimental.pallas import tpu as pltpu


_VMEM_LIMIT = 48 * 1024 * 1024      # sized for v7x (64 MiB physical); fine on v5e/v6e


# ----------------------------------------------------------------------------
# Pallas kernels (all operate on (C, S) tiles: channels on sublanes, S on lanes)
# ----------------------------------------------------------------------------

def _stage1_kernel(a1_ref, xl_ref, wg1_ref, wx1_ref, b1_ref, p1w_ref, p1b_ref,
                   o_ref):
    """First attention stage.

    a1_ref : (K1p, TS) bf16  transposed im2col of first_layer_f (W_g1 conv)
    xl_ref : (c_l, TS) f32   x_l (channels on sublanes, spatial on lanes)
    out    : (c_l, TS) f32   xl_after_first_att = x_l * sigmoid(psi1(relu(...)))
    """
    xl = xl_ref[...]
    g = jnp.dot(wg1_ref[...], a1_ref[...], preferred_element_type=jnp.float32)
    x1 = jnp.dot(wx1_ref[...], xl, preferred_element_type=jnp.float32)
    h = jnp.maximum(g + x1 + b1_ref[...], 0.0)                     # (c_l, TS)
    # psi1: 1-channel 1x1 conv == per-channel scale + sublane reduce (VPU/XLU)
    z = jnp.sum(h * p1w_ref[...], axis=0, keepdims=True) + p1b_ref[0]  # (1, TS)
    att1 = pl.reciprocal(1.0 + jnp.exp(-z), approx=True)           # sigmoid, EUP
    o_ref[...] = xl * att1                                         # lane-dense store


def _att2_kernel(a2_ref, xg_ref, wx2_ref, wg2_ref, b2_ref, p2w_ref, p2b_ref,
                 o_ref):
    """Second attention map (at the x_g resolution).

    a2_ref : (K2p, TSG) bf16  transposed im2col (stride 2, pad 1) of xl1 (W_x2)
    xg_ref : (c_g, TSG) f32   x_g                                   (W_g2 1x1)
    out    : (1,   TSG) f32   att_map_second = sigmoid(psi2(relu(...)))
    """
    xl_c = jnp.dot(wx2_ref[...], a2_ref[...], preferred_element_type=jnp.float32)
    xg_c = jnp.dot(wg2_ref[...], xg_ref[...], preferred_element_type=jnp.float32)
    h = jnp.maximum(xg_c + xl_c + b2_ref[...], 0.0)                # (c_g, TSG)
    z = jnp.sum(h * p2w_ref[...], axis=0, keepdims=True) + p2b_ref[0]
    o_ref[...] = pl.reciprocal(1.0 + jnp.exp(-z), approx=True)


def _upsample_kernel(att_ref, md_ref, mhwt_ref, o_ref):
    """Separable trilinear (align_corners=True) upsample of the attention map.

    att_ref : (Dg, Hg*Wg)   attention map, depth on sublanes, H*W on lanes
    md_ref  : (Dl, Dg)      depth interpolation matrix
    mhwt_ref: (Hg*Wg, Hl*Wl) kron(Mh, Mw)^T
    out     : (Dl, Hl*Wl)
    """
    # TODO(synk): for very large H*W, split further into the full 3-factor
    #             (Md, Mh, Mw) separable form instead of the 2-factor one.
    t = jnp.dot(md_ref[...], att_ref[...], preferred_element_type=jnp.float32)
    o_ref[...] = jnp.dot(t, mhwt_ref[...], preferred_element_type=jnp.float32)


def _mul_kernel(xl1_ref, up_ref, o_ref):
    """out = xl_after_first_att * upsampled attention map (lane-dense VPU)."""
    o_ref[...] = xl1_ref[...] * up_ref[...]


# ----------------------------------------------------------------------------
# Glue helpers: transposed im2col, interpolation matrices, padding, tiling
# ----------------------------------------------------------------------------

def im2col3d_t(x, ksize=3, stride=1, pad=1):
    """x: (N, Cin, D, H, W) -> (N, Cin*k^3, Do*Ho*Wo); row order (ci, kd, kh, kw).

    Built with reshapes only (no spatial transposes).
    """
    N, C, D, H, W = x.shape
    xp = jnp.pad(x, ((0, 0), (0, 0), (pad, pad), (pad, pad), (pad, pad)))
    Do = (D + 2 * pad - ksize) // stride + 1
    Ho = (H + 2 * pad - ksize) // stride + 1
    Wo = (W + 2 * pad - ksize) // stride + 1
    cols = []
    for kd in range(ksize):
        for kh in range(ksize):
            for kw in range(ksize):
                cols.append(xp[:, :,
                                kd:kd + stride * (Do - 1) + 1:stride,
                                kh:kh + stride * (Ho - 1) + 1:stride,
                                kw:kw + stride * (Wo - 1) + 1:stride])
    patches = jnp.stack(cols, axis=2)                  # (N, C, 27, Do, Ho, Wo)
    return patches.reshape(N, C * ksize ** 3, Do * Ho * Wo), (Do, Ho, Wo)


def interp_matrix(n_out, n_in):
    """1D linear interpolation matrix matching F.interpolate(align_corners=True)."""
    i = jnp.arange(n_out, dtype=jnp.float32)
    if n_out == 1:
        pos = jnp.zeros((1,), jnp.float32)
    else:
        pos = i * (n_in - 1) / (n_out - 1)
    lo = jnp.clip(jnp.floor(pos).astype(jnp.int32), 0, n_in - 1)
    hi = jnp.clip(lo + 1, 0, n_in - 1)
    frac = pos - lo.astype(jnp.float32)
    M = jnp.zeros((n_out, n_in), jnp.float32)
    rows = jnp.arange(n_out)
    M = M.at[rows, lo].add(1.0 - frac)
    M = M.at[rows, hi].add(frac)
    return M


def _round_up(x, m):
    return ((x + m - 1) // m) * m


def _pad_axis(x, axis, to):
    if x.shape[axis] == to:
        return x
    pad = [(0, 0)] * x.ndim
    pad[axis] = (0, to - x.shape[axis])
    return jnp.pad(x, pad)


def _pick_tile(s, target):
    """Largest multiple-of-128 tile <= target that divides s (or s itself)."""
    if s <= target or s % 128 != 0:
        return s
    t = (target // 128) * 128
    while s % t != 0:
        t -= 128
    return t


def build_params(key, c_l, c_g, c_init):
    ks = jax.random.split(key, 12)
    w = lambda k, s: jax.random.normal(k, s, jnp.float32) * 0.1
    return dict(
        Wx1=w(ks[0], (c_l, c_l, 1, 1, 1)),  bx1=w(ks[1], (c_l,)),
        Wx2=w(ks[2], (c_g, c_l, 3, 3, 3)),  bx2=w(ks[3], (c_g,)),
        Wg1=w(ks[4], (c_l, c_init, 3, 3, 3)), bg1=w(ks[5], (c_l,)),
        Wg2=w(ks[6], (c_g, c_g, 1, 1, 1)),  bg2=w(ks[7], (c_g,)),
        P1=w(ks[8], (1, c_l, 1, 1, 1)),     p1b=w(ks[9], (1,)),
        P2=w(ks[10], (1, c_g, 1, 1, 1)),    p2b=w(ks[11], (1,)),
    )


# ----------------------------------------------------------------------------
# pallas_call wrappers
# ----------------------------------------------------------------------------

def _stage1_call(a1p, xlm, wg1, wx1, b1, p1w, p1b, tile_s):
    N, K1p, Sl = a1p.shape
    c_l = xlm.shape[1]
    return pl.pallas_call(
        _stage1_kernel,
        out_shape=jax.ShapeDtypeStruct((N, c_l, Sl), jnp.float32),
        grid=(N, Sl // tile_s),
        in_specs=[
            pl.BlockSpec((None, K1p, tile_s), lambda b, s: (b, 0, s)),
            pl.BlockSpec((None, c_l, tile_s), lambda b, s: (b, 0, s)),
            pl.BlockSpec((c_l, K1p), lambda b, s: (0, 0)),
            pl.BlockSpec((c_l, c_l), lambda b, s: (0, 0)),
            pl.BlockSpec((c_l, 1), lambda b, s: (0, 0)),
            pl.BlockSpec((c_l, 1), lambda b, s: (0, 0)),
            pl.BlockSpec(memory_space=pltpu.MemorySpace.SMEM),
        ],
        out_specs=pl.BlockSpec((None, c_l, tile_s), lambda b, s: (b, 0, s)),
        compiler_params=pltpu.CompilerParams(
            dimension_semantics=("parallel", "parallel"),
            vmem_limit_bytes=_VMEM_LIMIT),
    )(a1p, xlm, wg1, wx1, b1, p1w, p1b)


def _att2_call(a2p, xgm, wx2, wg2, b2, p2w, p2b, tile_sg):
    N, K2p, Sg = a2p.shape
    c_g = xgm.shape[1]
    return pl.pallas_call(
        _att2_kernel,
        out_shape=jax.ShapeDtypeStruct((N, 1, Sg), jnp.float32),
        grid=(N, Sg // tile_sg),
        in_specs=[
            pl.BlockSpec((None, K2p, tile_sg), lambda b, s: (b, 0, s)),
            pl.BlockSpec((None, c_g, tile_sg), lambda b, s: (b, 0, s)),
            pl.BlockSpec((c_g, K2p), lambda b, s: (0, 0)),
            pl.BlockSpec((c_g, c_g), lambda b, s: (0, 0)),
            pl.BlockSpec((c_g, 1), lambda b, s: (0, 0)),
            pl.BlockSpec((c_g, 1), lambda b, s: (0, 0)),
            pl.BlockSpec(memory_space=pltpu.MemorySpace.SMEM),
        ],
        out_specs=pl.BlockSpec((None, 1, tile_sg), lambda b, s: (b, 0, s)),
        compiler_params=pltpu.CompilerParams(
            dimension_semantics=("parallel", "parallel"),
            vmem_limit_bytes=_VMEM_LIMIT),
    )(a2p, xgm, wx2, wg2, b2, p2w, p2b)


def _upsample_call(att2_2d, Md, MhwT):
    N, Dg, HWg = att2_2d.shape
    Dl = Md.shape[0]
    HWl = MhwT.shape[1]
    return pl.pallas_call(
        _upsample_kernel,
        out_shape=jax.ShapeDtypeStruct((N, Dl, HWl), jnp.float32),
        grid=(N,),
        in_specs=[
            pl.BlockSpec((None, Dg, HWg), lambda b: (b, 0, 0)),
            pl.BlockSpec((Dl, Dg), lambda b: (0, 0)),
            pl.BlockSpec((HWg, HWl), lambda b: (0, 0)),
        ],
        out_specs=pl.BlockSpec((None, Dl, HWl), lambda b: (b, 0, 0)),
        compiler_params=pltpu.CompilerParams(
            dimension_semantics=("parallel",),
            vmem_limit_bytes=_VMEM_LIMIT),
    )(att2_2d, Md, MhwT)


def _mul_call(xl1, up, tile_s):
    N, c_l, Sl = xl1.shape
    return pl.pallas_call(
        _mul_kernel,
        out_shape=jax.ShapeDtypeStruct((N, c_l, Sl), jnp.float32),
        grid=(N, Sl // tile_s),
        in_specs=[
            pl.BlockSpec((None, c_l, tile_s), lambda b, s: (b, 0, s)),
            pl.BlockSpec((None, 1, tile_s), lambda b, s: (b, 0, s)),
        ],
        out_specs=pl.BlockSpec((None, c_l, tile_s), lambda b, s: (b, 0, s)),
        compiler_params=pltpu.CompilerParams(
            dimension_semantics=("parallel", "parallel"),
            vmem_limit_bytes=_VMEM_LIMIT),
    )(xl1, up)


# ----------------------------------------------------------------------------
# Forward
# ----------------------------------------------------------------------------

def csa3d_forward(x_l, x_g, first_layer_f, p):
    """Pallas implementation of CSA3D.forward. Inputs/outputs are NCDHW f32."""
    N, c_l, Dl, Hl, Wl = x_l.shape
    _, c_g, Dg, Hg, Wg = x_g.shape
    c_init = first_layer_f.shape[1]
    Sl, Sg = Dl * Hl * Wl, Dg * Hg * Wg
    HWl, HWg = Hl * Wl, Hg * Wg

    # NOTE: shapes are chosen so the two conditional F.interpolate branches in
    # the reference forward are no-ops (spatial sizes already match).
    # TODO(synk): mismatched-shape branches would reuse the same separable
    #             interpolation-matmul trick used for the final upsample.

    # ---- stage 1: att1 + multiply ------------------------------------------
    a1, _ = im2col3d_t(first_layer_f, ksize=3, stride=1, pad=1)   # (N, c_init*27, Sl)
    K1 = c_init * 27
    K1p = _round_up(K1, 128)                                      # full MXU passes
    a1p = _pad_axis(a1, 1, K1p).astype(jnp.bfloat16)              # halve 27x traffic
    wg1 = _pad_axis(p['Wg1'].reshape(c_l, K1), 1, K1p).astype(jnp.bfloat16)
    wx1 = p['Wx1'].reshape(c_l, c_l)
    b1 = (p['bg1'] + p['bx1']).reshape(c_l, 1)                    # fold both biases
    p1w = p['P1'].reshape(c_l, 1)
    p1b = p['p1b'].reshape((1,))

    xlm = x_l.reshape(N, c_l, Sl)                                 # pure reshape
    tile_s = _pick_tile(Sl, 8192)
    xl1 = _stage1_call(a1p, xlm, wg1, wx1, b1, p1w, p1b, tile_s)  # (N, c_l, Sl)

    # ---- stage 2: att2 at x_g resolution ------------------------------------
    # (N, c_l, Sl) -> NCDHW is a pure reshape: no inter-stage transpose pass.
    # TODO(synk): perform the stride-2 3x3x3 im2col inside the kernel (strided
    #             reads / manual DMA) to avoid materializing the 27x patch
    #             matrix in HBM.
    a2, (Do, Ho, Wo) = im2col3d_t(xl1.reshape(N, c_l, Dl, Hl, Wl),
                                  ksize=3, stride=2, pad=1)       # (N, c_l*27, Sg)
    assert (Do, Ho, Wo) == (Dg, Hg, Wg)
    K2 = c_l * 27
    K2p = _round_up(K2, 128)
    a2p = _pad_axis(a2, 1, K2p).astype(jnp.bfloat16)
    wx2 = _pad_axis(p['Wx2'].reshape(c_g, K2), 1, K2p).astype(jnp.bfloat16)
    wg2 = p['Wg2'].reshape(c_g, c_g)
    b2 = (p['bg2'] + p['bx2']).reshape(c_g, 1)
    p2w = p['P2'].reshape(c_g, 1)
    p2b = p['p2b'].reshape((1,))

    xgm = x_g.reshape(N, c_g, Sg)
    tile_sg = _pick_tile(Sg, 8192)
    att2 = _att2_call(a2p, xgm, wx2, wg2, b2, p2w, p2b, tile_sg)  # (N, 1, Sg)

    # ---- separable trilinear upsample (align_corners=True) ------------------
    Md = interp_matrix(Dl, Dg)                                    # (Dl, Dg)
    MhwT = jnp.kron(interp_matrix(Hl, Hg), interp_matrix(Wl, Wg)).T  # (HWg, HWl)
    up = _upsample_call(att2.reshape(N, Dg, HWg), Md, MhwT)       # (N, Dl, HWl)

    # ---- final multiply ------------------------------------------------------
    out = _mul_call(xl1, up.reshape(N, 1, Sl), tile_s)            # (N, c_l, Sl)
    return out.reshape(N, c_l, Dl, Hl, Wl)                        # NCDHW, reshape only


# ----------------------------------------------------------------------------
# Pure-JAX reference (mirrors the PyTorch module) for the correctness check
# ----------------------------------------------------------------------------

def ref_forward(x_l, x_g, flf, p):
    def conv(x, w, b, stride, pad):
        y = lax.conv_general_dilated(
            x, w, (stride,) * 3, [(pad, pad)] * 3,
            dimension_numbers=('NCDHW', 'OIDHW', 'NCDHW'),
            precision=lax.Precision.HIGHEST)
        return y + b.reshape(1, -1, 1, 1, 1)

    g1 = conv(flf, p['Wg1'], p['bg1'], 1, 1)
    x1 = conv(x_l, p['Wx1'], p['bx1'], 1, 0)
    att1 = jax.nn.sigmoid(conv(jax.nn.relu(g1 + x1), p['P1'], p['p1b'], 1, 0))
    xl1 = x_l * att1
    xg_c = conv(x_g, p['Wg2'], p['bg2'], 1, 0)
    xl_c = conv(xl1, p['Wx2'], p['bx2'], 2, 1)
    att2 = jax.nn.sigmoid(conv(jax.nn.relu(xg_c + xl_c), p['P2'], p['p2b'], 1, 0))
    Dl, Hl, Wl = x_l.shape[2:]
    Dg, Hg, Wg = att2.shape[2:]
    Md, Mh, Mw = interp_matrix(Dl, Dg), interp_matrix(Hl, Hg), interp_matrix(Wl, Wg)
    up = jnp.einsum('da,hb,wc,nabc->ndhw', Md, Mh, Mw, att2[:, 0],
                    precision=lax.Precision.HIGHEST)[:, None]
    return xl1 * up


# ----------------------------------------------------------------------------

if __name__ == "__main__":
    key = jax.random.PRNGKey(0)
    N, c_l, c_g, c_init = 2, 4, 8, 4
    Dl = Hl = Wl = 8
    Dg = Hg = Wg = 4          # = ceil(Dl/2) so W_x2 output matches x_g spatially

    k1, k2, k3, kp = jax.random.split(key, 4)
    x_l = jax.random.normal(k1, (N, c_l, Dl, Hl, Wl), jnp.float32)
    x_g = jax.random.normal(k2, (N, c_g, Dg, Hg, Wg), jnp.float32)
    first_layer_f = jax.random.normal(k3, (N, c_init, Dl, Hl, Wl), jnp.float32)
    params = build_params(kp, c_l, c_g, c_init)

    out = csa3d_forward(x_l, x_g, first_layer_f, params)
    out = jax.block_until_ready(out)
    assert out.shape == (N, c_l, Dl, Hl, Wl)

    ref = jax.block_until_ready(ref_forward(x_l, x_g, first_layer_f, params))
    # Tolerance accounts for bf16 im2col/weight inputs (f32 accumulation).
    err = float(jnp.max(jnp.abs(out - ref)))
    assert jnp.allclose(out, ref, atol=2e-2, rtol=2e-2), f"max abs err {err}"

    print("KERNEL_OK")
</pallas_src>

<mosaic_0001>
module attributes {stable_mosaic.version = 11 : i64} {
  func.func @_stage1_kernel(%arg0: i32, %arg1: i32, %arg2: memref<1x128x512xbf16, #tpu.memory_space<vmem>>, %arg3: memref<1x4x512xf32, #tpu.memory_space<vmem>>, %arg4: memref<4x128xbf16, #tpu.memory_space<vmem>>, %arg5: memref<4x4xf32, #tpu.memory_space<vmem>>, %arg6: memref<4x1xf32, #tpu.memory_space<vmem>>, %arg7: memref<4x1xf32, #tpu.memory_space<vmem>>, %arg8: memref<1xf32, #tpu.memory_space<smem>>, %arg9: memref<1x4x512xf32, #tpu.memory_space<vmem>>) attributes {dimension_semantics = [#tpu.dimension_semantics<parallel>, #tpu.dimension_semantics<parallel>], iteration_bounds = array<i64: 2, 1>, scalar_prefetch = 0 : i64, scratch_operands = 0 : i64, tpu.core_type = #tpu.core_type<tc>, window_params = [{transform_indices = @transform_0, window_bounds = array<i64: 1, 128, 512>}, {transform_indices = @transform_1, window_bounds = array<i64: 1, 4, 512>}, {pipeline_mode = #tpu.pipeline_mode<synchronous>, transform_indices = @transform_2, window_bounds = array<i64: 4, 128>}, {pipeline_mode = #tpu.pipeline_mode<synchronous>, transform_indices = @transform_3, window_bounds = array<i64: 4, 4>}, {pipeline_mode = #tpu.pipeline_mode<synchronous>, transform_indices = @transform_4, window_bounds = array<i64: 4, 1>}, {pipeline_mode = #tpu.pipeline_mode<synchronous>, transform_indices = @transform_5, window_bounds = array<i64: 4, 1>}, {transform_indices = @transform_6, window_bounds = array<i64: 1>}, {transform_indices = @transform_7, window_bounds = array<i64: 1, 4, 512>}]} {
    %c0 = arith.constant 0 : index
    %c0_0 = arith.constant 0 : index
    %c0_1 = arith.constant 0 : index
    %0 = vector.load %arg3[%c0, %c0_0, %c0_1] : memref<1x4x512xf32, #tpu.memory_space<vmem>>, vector<1x4x512xf32>
    %1 = vector.shape_cast %0 : vector<1x4x512xf32> to vector<4x512xf32>
    %c0_2 = arith.constant 0 : index
    %c0_3 = arith.constant 0 : index
    %2 = vector.load %arg4[%c0_2, %c0_3] : memref<4x128xbf16, #tpu.memory_space<vmem>>, vector<4x128xbf16>
    %c0_4 = arith.constant 0 : index
    %c0_5 = arith.constant 0 : index
    %c0_6 = arith.constant 0 : index
    %3 = vector.load %arg2[%c0_4, %c0_5, %c0_6] : memref<1x128x512xbf16, #tpu.memory_space<vmem>>, vector<1x128x512xbf16>
    %4 = vector.shape_cast %3 : vector<1x128x512xbf16> to vector<128x512xbf16>
    %cst = arith.constant dense<0.000000e+00> : vector<4x512xf32>
    %5 = tpu.matmul %2, %4, %cst {dimension_numbers = #tpu.dot_dimension_numbers<[1], [0], [0], [1], [0, 0, 1, 1], [], []>} : vector<4x128xbf16>, vector<128x512xbf16>, vector<4x512xf32> -> vector<4x512xf32>
    %c0_7 = arith.constant 0 : index
    %c0_8 = arith.constant 0 : index
    %6 = vector.load %arg5[%c0_7, %c0_8] : memref<4x4xf32, #tpu.memory_space<vmem>>, vector<4x4xf32>
    %cst_9 = arith.constant dense<0.000000e+00> : vector<4x512xf32>
    %7 = tpu.matmul %6, %1, %cst_9 {dimension_numbers = #tpu.dot_dimension_numbers<[1], [0], [0], [1], [0, 0, 1, 1], [], []>} : vector<4x4xf32>, vector<4x512xf32>, vector<4x512xf32> -> vector<4x512xf32>
    %8 = arith.addf %5, %7 : vector<4x512xf32>
    %c0_10 = arith.constant 0 : index
    %c0_11 = arith.constant 0 : index
    %9 = vector.load %arg6[%c0_10, %c0_11] : memref<4x1xf32, #tpu.memory_space<vmem>>, vector<4x1xf32>
    %10 = vector.broadcast %9 : vector<4x1xf32> to vector<4x512xf32>
    %11 = arith.addf %8, %10 : vector<4x512xf32>
    %cst_12 = arith.constant 0.000000e+00 : f32
    %12 = vector.broadcast %cst_12 : f32 to vector<4x512xf32>
    %13 = arith.maximumf %11, %12 : vector<4x512xf32>
    %c0_13 = arith.constant 0 : index
    %c0_14 = arith.constant 0 : index
    %14 = vector.load %arg7[%c0_13, %c0_14] : memref<4x1xf32, #tpu.memory_space<vmem>>, vector<4x1xf32>
    %15 = vector.broadcast %14 : vector<4x1xf32> to vector<4x512xf32>
    %16 = arith.mulf %13, %15 : vector<4x512xf32>
    %cst_15 = arith.constant dense<0.000000e+00> : vector<512xf32>
    %17 = vector.multi_reduction <add>, %16, %cst_15 [0] : vector<4x512xf32> to vector<512xf32>
    %18 = vector.shape_cast %17 : vector<512xf32> to vector<1x512xf32>
    %c0_16 = arith.constant 0 : index
    %19 = memref.load %arg8[%c0_16] : memref<1xf32, #tpu.memory_space<smem>>
    %20 = vector.broadcast %19 : f32 to vector<1x512xf32>
    %21 = arith.addf %18, %20 : vector<1x512xf32>
    %cst_17 = arith.constant 0.000000e+00 : f32
    %22 = vector.broadcast %cst_17 : f32 to vector<1x512xf32>
    %23 = arith.subf %22, %21 : vector<1x512xf32>
    %24 = math.exp %23 : vector<1x512xf32>
    %cst_18 = arith.constant 1.000000e+00 : f32
    %25 = vector.broadcast %cst_18 : f32 to vector<1x512xf32>
    %26 = arith.addf %25, %24 : vector<1x512xf32>
    %27 = tpu.reciprocal %26 {approx = true} : vector<1x512xf32> -> vector<1x512xf32>
    %28 = vector.broadcast %27 : vector<1x512xf32> to vector<4x512xf32>
    %29 = arith.mulf %1, %28 : vector<4x512xf32>
    %c0_19 = arith.constant 0 : index
    %c0_20 = arith.constant 0 : index
    %c0_21 = arith.constant 0 : index
    %30 = vector.load %arg9[%c0_19, %c0_20, %c0_21] : memref<1x4x512xf32, #tpu.memory_space<vmem>>, vector<1x4x512xf32>
    %31 = vector.shape_cast %30 : vector<1x4x512xf32> to vector<4x512xf32>
    %32 = vector.shape_cast %29 : vector<4x512xf32> to vector<1x4x512xf32>
    tpu.vector_store %arg9[%c0_19, %c0_20, %c0_21], %32 {strides = array<i32>} : memref<1x4x512xf32, #tpu.memory_space<vmem>>, vector<1x4x512xf32>,
    return
  }
  func.func @transform_0(%arg0: i32, %arg1: i32) -> (i32, i32, i32) {
    %c0_i32 = arith.constant 0 : i32
    %c0_i32_0 = arith.constant 0 : i32
    return %arg0, %c0_i32, %arg1 : i32, i32, i32
  }
  func.func @transform_1(%arg0: i32, %arg1: i32) -> (i32, i32, i32) {
    %c0_i32 = arith.constant 0 : i32
    %c0_i32_0 = arith.constant 0 : i32
    return %arg0, %c0_i32, %arg1 : i32, i32, i32
  }
  func.func @transform_2(%arg0: i32, %arg1: i32) -> (i32, i32) {
    %c0_i32 = arith.constant 0 : i32
    %c0_i32_0 = arith.constant 0 : i32
    %c0_i32_1 = arith.constant 0 : i32
    return %c0_i32, %c0_i32_0 : i32, i32
  }
  func.func @transform_3(%arg0: i32, %arg1: i32) -> (i32, i32) {
    %c0_i32 = arith.constant 0 : i32
    %c0_i32_0 = arith.constant 0 : i32
    %c0_i32_1 = arith.constant 0 : i32
    return %c0_i32, %c0_i32_0 : i32, i32
  }
  func.func @transform_4(%arg0: i32, %arg1: i32) -> (i32, i32) {
    %c0_i32 = arith.constant 0 : i32
    %c0_i32_0 = arith.constant 0 : i32
    %c0_i32_1 = arith.constant 0 : i32
    return %c0_i32, %c0_i32_0 : i32, i32
  }
  func.func @transform_5(%arg0: i32, %arg1: i32) -> (i32, i32) {
    %c0_i32 = arith.constant 0 : i32
    %c0_i32_0 = arith.constant 0 : i32
    %c0_i32_1 = arith.constant 0 : i32
    return %c0_i32, %c0_i32_0 : i32, i32
  }
  func.func @transform_6(%arg0: i32, %arg1: i32) -> i32 {
    %c0_i32 = arith.constant 0 : i32
    %c0_i32_0 = arith.constant 0 : i32
    return %c0_i32 : i32
  }
  func.func @transform_7(%arg0: i32, %arg1: i32) -> (i32, i32, i32) {
    %c0_i32 = arith.constant 0 : i32
    %c0_i32_0 = arith.constant 0 : i32
    return %arg0, %c0_i32, %arg1 : i32, i32, i32
  }
}

</mosaic_0001>

<llo_original>
// kernel: tpu_custom_call.1
$region0: #{tpu_custom_call.1}
  #allocation0 [shape = 'u32[]', space=smem, size = 0x4, offset = 0x4, fixed_abs, tag = 'smem constant byte address 0x4 - core index']
  #allocation1 [shape = 'u32[144,128]{1,0:T(1,128)}', space=vmem, size = 0x12000, scoped, tag = 'internal scratch']
  #allocation2 [shape = 'f32[1]{0:T(128)S(6)}', space=smem, size = 0x200, scoped, tag = 'scoped memory for tpu_custom_call.1']
  %s0 = inlined_call_operand.hbm [shape: bf16[2,128,512], index: 0, kind: input, shape index: {}]
  %s1 = inlined_call_operand.hbm [shape: f32[2,4,512], index: 1, kind: input, shape index: {}]
  %s2 = inlined_call_operand.vmem [shape: bf16[4,128], index: 2, kind: input, shape index: {}]
  %s3 = inlined_call_operand.vmem [shape: f32[4,4], index: 3, kind: input, shape index: {}]
  %s4 = inlined_call_operand.vmem [shape: f32[4,1], index: 4, kind: input, shape index: {}]
  %s5 = inlined_call_operand.vmem [shape: f32[4,1], index: 5, kind: input, shape index: {}]
  %s6 = inlined_call_operand.<no memory space> [shape: f32[1], index: 6, kind: input, shape index: {}]
  %s7 = inlined_call_operand.hbm [shape: f32[2,4,512], index: 7, kind: output, shape index: {}]
  %s8 = sld [smem:[#allocation0]]
  $region69: #{tpu_custom_call.1} parent=0
    _
  %s10 = ssub.s32 1, %s8
  %s11 = scalar_select 0, %s10, %s8
  %12 = sst [smem:[#allocation2]] %s6
  $region1: #{tpu_custom_call.1} parent=0
    #allocation3 [shape = 'u8[262144]{0}', space=vmem, size = 0x40000, scoped, tag = 'input window, operand 0']
    #allocation4 [shape = 's32[2]{0}', space=sflag, size = 0x8, scoped, tag = 'scoped memory for tpu_custom_call.1']
    #allocation5 [shape = 's32[2]{0}', space=sflag, size = 0x8, scoped, tag = 'scoped memory for tpu_custom_call.1']
    #allocation6 [shape = 'u8[16384]{0}', space=vmem, size = 0x4000, scoped, tag = 'input window, operand 1']
    #allocation7 [shape = 's32[2]{0}', space=sflag, size = 0x8, scoped, tag = 'scoped memory for tpu_custom_call.1']
    #allocation8 [shape = 'u8[16384]{0}', space=vmem, size = 0x4000, scoped, tag = 'output window, operand 0']
    %13 = vsyncpa [#allocation4], 0
    %s14 = scalar_lea.sflag [#allocation4], 1
    %15 = vsyncpa %s14, 0
    %16 = vsyncpa [#allocation7], 0
    %s17 = scalar_lea.sflag [#allocation7], 1
    %18 = vsyncpa %s17, 0
    %19 = vsyncpa [#allocation5], 0
    %s20 = scalar_lea.sflag [#allocation5], 1
    %21 = vsyncpa %s20, 0
    loop: start=0, step=1, limit=4
    $region2: #{tpu_custom_call.1} parent=1 // loop_pre_header
      _
    $region3: #{tpu_custom_call.1} parent=1 // loop_header
      %s23 = sphi 0, %s27
      %p24 = scmp.ge.s32.totalorder %s23, 4
      %s30 = sphi 0, %s42
      %s31 = sphi 0, %s38
      %s32 = sphi 0, %s30
      %s33 = sphi 0, %s31
      %s34 = sphi 0, %s32
      %s35 = sphi 0, %s33
      %s47 = sphi 0, %s49
      %s50 = sphi 0, %s47
      %s51 = sphi 0, %s50
      %s67 = sphi 0, %s51
      %s75 = sphi 0, %s77
      %s78 = sphi 0, %s75
      %s79 = sphi 0, %s78
      %s95 = sphi 0, %s79
      %s99 = sphi 0, %s99
      %s101 = sphi 0, %s99
      %s102 = sphi 0, %s101
      %s116 = sphi 0, %s102
      %s120 = sphi 0, %s120
      %s122 = sphi 0, %s120
      %s123 = sphi 0, %s122
      %s137 = sphi 0, %s123
      %s141 = sphi 0, %s141
      %s143 = sphi 0, %s141
      %s144 = sphi 0, %s143
      %s158 = sphi 0, %s144
      %s162 = sphi 0, %s162
      %s164 = sphi 0, %s162
      %s165 = sphi 0, %s164
      %s179 = sphi 0, %s165
      %s183 = sphi 0, %s183
      %s185 = sphi 0, %s183
      %s186 = sphi 0, %s185
      %s200 = sphi 0, %s186
      %s208 = sphi 0, %s210
      %s211 = sphi 0, %s208
      %s212 = sphi 0, %s211
      %s228 = sphi 0, %s212
    $region4: #{tpu_custom_call.1} parent=1 // loop_header_branch
      %26 = sbr.rel (%p24) target = $region8
    $region5: #{tpu_custom_call.1} parent=1 // loop_body
      %s28 = ssub.s32 %s23, 1
      %s29 = ssub.s32 %s23, 2
      %s36 = sadd.s32 1, %s31
      %p37 = scmp.ge.s32.totalorder %s36, 1
      %s38 = scalar_select %p37, 0, %s36
      %s39 = sadd.s32 1, %s30
      %s40 = scalar_select %p37, %s39, %s30
      %p41 = scmp.ge.s32.totalorder %s40, 2
      %s42 = scalar_select %p41, 0, %s40
      %s43 = ssub.s32 %s30, %s42
      %s44 = ssub.s32 %s31, %s38
      %s45 = sor.u32 %s43, %s44
      %p46 = scmp.eq.s32.totalorder %s45, 0
      %s48 = sadd.s32 %s47, 1
      %s49 = scalar_select %p46, %s47, %s48
      %p52 = pneg %p46
      %p53 = scmp.eq.s32.totalorder %s23, 1
      %p54 = por %p52, %p53
      %p55 = scmp.ne.s32.totalorder %s47, %s50
      %p56 = scmp.eq.s32.totalorder %s23, 0
      %p57 = por %p55, %p56
      %p58 = scmp.ne.s32.totalorder %s47, %s50
      %p59 = scmp.eq.s32.totalorder %s28, 1
      %p60 = por %p58, %p59
      %p61 = scmp.ne.s32.totalorder %s50, %s51
      %p62 = scmp.eq.s32.totalorder %s28, 0
      %p63 = por %p61, %p62
      %p64 = scmp.ne.s32.totalorder %s50, %s51
      %p65 = scmp.eq.s32.totalorder %s29, 1
      %p66 = por %p64, %p65
      %p68 = scmp.ne.s32.totalorder %s51, %s67
      %p69 = scmp.eq.s32.totalorder %s29, 0
      %p70 = por %p68, %p69
      %s71 = ssub.s32 %s30, %s42
      %s72 = ssub.s32 %s31, %s38
      %s73 = sor.u32 %s71, %s72
      %p74 = scmp.eq.s32.totalorder %s73, 0
      %s76 = sadd.s32 %s75, 1
      %s77 = scalar_select %p74, %s75, %s76
      %p80 = pneg %p74
      %p81 = scmp.eq.s32.totalorder %s23, 1
      %p82 = por %p80, %p81
      %p83 = scmp.ne.s32.totalorder %s75, %s78
      %p84 = scmp.eq.s32.totalorder %s23, 0
      %p85 = por %p83, %p84
      %p86 = scmp.ne.s32.totalorder %s75, %s78
      %p87 = scmp.eq.s32.totalorder %s28, 1
      %p88 = por %p86, %p87
      %p89 = scmp.ne.s32.totalorder %s78, %s79
      %p90 = scmp.eq.s32.totalorder %s28, 0
      %p91 = por %p89, %p90
      %p92 = scmp.ne.s32.totalorder %s78, %s79
      %p93 = scmp.eq.s32.totalorder %s29, 1
      %p94 = por %p92, %p93
      %p96 = scmp.ne.s32.totalorder %s79, %s95
      %p97 = scmp.eq.s32.totalorder %s29, 0
      %p98 = por %p96, %p97
      %s100 = sadd.s32 %s99, 1
      %p103 = scmp.eq.s32.totalorder %s23, 1
      %p104 = scmp.ne.s32.totalorder %s99, %s101
      %p105 = scmp.eq.s32.totalorder %s23, 0
      %p106 = por %p104, %p105
      %p107 = scmp.ne.s32.totalorder %s99, %s101
      %p108 = scmp.eq.s32.totalorder %s28, 1
      %p109 = por %p107, %p108
      %p110 = scmp.ne.s32.totalorder %s101, %s102
      %p111 = scmp.eq.s32.totalorder %s28, 0
      %p112 = por %p110, %p111
      %p113 = scmp.ne.s32.totalorder %s101, %s102
      %p114 = scmp.eq.s32.totalorder %s29, 1
      %p115 = por %p113, %p114
      %p117 = scmp.ne.s32.totalorder %s102, %s116
      %p118 = scmp.eq.s32.totalorder %s29, 0
      %p119 = por %p117, %p118
      %s121 = sadd.s32 %s120, 1
      %p124 = scmp.eq.s32.totalorder %s23, 1
      %p125 = scmp.ne.s32.totalorder %s120, %s122
      %p126 = scmp.eq.s32.totalorder %s23, 0
      %p127 = por %p125, %p126
      %p128 = scmp.ne.s32.totalorder %s120, %s122
      %p129 = scmp.eq.s32.totalorder %s28, 1
      %p130 = por %p128, %p129
      %p131 = scmp.ne.s32.totalorder %s122, %s123
      %p132 = scmp.eq.s32.totalorder %s28, 0
      %p133 = por %p131, %p132
      %p134 = scmp.ne.s32.totalorder %s122, %s123
      %p135 = scmp.eq.s32.totalorder %s29, 1
      %p136 = por %p134, %p135
      %p138 = scmp.ne.s32.totalorder %s123, %s137
      %p139 = scmp.eq.s32.totalorder %s29, 0
      %p140 = por %p138, %p139
      %s142 = sadd.s32 %s141, 1
      %p145 = scmp.eq.s32.totalorder %s23, 1
      %p146 = scmp.ne.s32.totalorder %s141, %s143
      %p147 = scmp.eq.s32.totalorder %s23, 0
      %p148 = por %p146, %p147
      %p149 = scmp.ne.s32.totalorder %s141, %s143
      %p150 = scmp.eq.s32.totalorder %s28, 1
      %p151 = por %p149, %p150
      %p152 = scmp.ne.s32.totalorder %s143, %s144
      %p153 = scmp.eq.s32.totalorder %s28, 0
      %p154 = por %p152, %p153
      %p155 = scmp.ne.s32.totalorder %s143, %s144
      %p156 = scmp.eq.s32.totalorder %s29, 1
      %p157 = por %p155, %p156
      %p159 = scmp.ne.s32.totalorder %s144, %s158
      %p160 = scmp.eq.s32.totalorder %s29, 0
      %p161 = por %p159, %p160
      %s163 = sadd.s32 %s162, 1
      %p166 = scmp.eq.s32.totalorder %s23, 1
      %p167 = scmp.ne.s32.totalorder %s162, %s164
      %p168 = scmp.eq.s32.totalorder %s23, 0
      %p169 = por %p167, %p168
      %p170 = scmp.ne.s32.totalorder %s162, %s164
      %p171 = scmp.eq.s32.totalorder %s28, 1
      %p172 = por %p170, %p171
      %p173 = scmp.ne.s32.totalorder %s164, %s165
      %p174 = scmp.eq.s32.totalorder %s28, 0
      %p175 = por %p173, %p174
      %p176 = scmp.ne.s32.totalorder %s164, %s165
      %p177 = scmp.eq.s32.totalorder %s29, 1
      %p178 = por %p176, %p177
      %p180 = scmp.ne.s32.totalorder %s165, %s179
      %p181 = scmp.eq.s32.totalorder %s29, 0
      %p182 = por %p180, %p181
      %s184 = sadd.s32 %s183, 1
      %p187 = scmp.eq.s32.totalorder %s23, 1
      %p188 = scmp.ne.s32.totalorder %s183, %s185
      %p189 = scmp.eq.s32.totalorder %s23, 0
      %p190 = por %p188, %p189
      %p191 = scmp.ne.s32.totalorder %s183, %s185
      %p192 = scmp.eq.s32.totalorder %s28, 1
      %p193 = por %p191, %p192
      %p194 = scmp.ne.s32.totalorder %s185, %s186
      %p195 = scmp.eq.s32.totalorder %s28, 0
      %p196 = por %p194, %p195
      %p197 = scmp.ne.s32.totalorder %s185, %s186
      %p198 = scmp.eq.s32.totalorder %s29, 1
      %p199 = por %p197, %p198
      %p201 = scmp.ne.s32.totalorder %s186, %s200
      %p202 = scmp.eq.s32.totalorder %s29, 0
      %p203 = por %p201, %p202
      %s204 = ssub.s32 %s30, %s42
      %s205 = ssub.s32 %s31, %s38
      %s206 = sor.u32 %s204, %s205
      %p207 = scmp.eq.s32.totalorder %s206, 0
      %s209 = sadd.s32 %s208, 1
      %s210 = scalar_select %p207, %s208, %s209
      %p213 = pneg %p207
      %p214 = scmp.eq.s32.totalorder %s23, 1
      %p215 = por %p213, %p214
      %p216 = scmp.ne.s32.totalorder %s208, %s211
      %p217 = scmp.eq.s32.totalorder %s23, 0
      %p218 = por %p216, %p217
      %p219 = scmp.ne.s32.totalorder %s208, %s211
      %p220 = scmp.eq.s32.totalorder %s28, 1
      %p221 = por %p219, %p220
      %p222 = scmp.ne.s32.totalorder %s211, %s212
      %p223 = scmp.eq.s32.totalorder %s28, 0
      %p224 = por %p222, %p223
      %p225 = scmp.ne.s32.totalorder %s211, %s212
      %p226 = scmp.eq.s32.totalorder %s29, 1
      %p227 = por %p225, %p226
      %p229 = scmp.ne.s32.totalorder %s212, %s228
      %p230 = scmp.eq.s32.totalorder %s29, 0
      %p231 = por %p229, %p230
      %p232 = scmp.le.s32.totalorder 1, %s23
      %p233 = scmp.lt.s32.totalorder %s23, 3
      %p234 = pnand %p232, %p233
      %p235 = pneg %p234
      // Predicated region
      $region9: #{tpu_custom_call.1} parent=5 // pred_check
        _
      $region10: #{tpu_custom_call.1} parent=5 // pred_check_branch
        %237 = sbr.rel (%p234) target = $region12
      $region11: #{tpu_custom_call.1} parent=5 // pred_region
        %s238 = ssub.s32 %s23, 1
        // Predicated region
        $region13: #{tpu_custom_call.1} parent=11 // pred_check
          %p239 = pneg %p112
        $region14: #{tpu_custom_call.1} parent=11 // pred_check_branch
          %241 = sbr.rel (%p239) target = $region16
        $region15: #{tpu_custom_call.1} parent=11 // pred_region
          _
        $region16: #{tpu_custom_call.1} parent=11 // pred_fallthru
          _
        // Predicated region
        $region17: #{tpu_custom_call.1} parent=11 // pred_check
          %p242 = pneg %p133
        $region18: #{tpu_custom_call.1} parent=11 // pred_check_branch
          %244 = sbr.rel (%p242) target = $region20
        $region19: #{tpu_custom_call.1} parent=11 // pred_region
          _
        $region20: #{tpu_custom_call.1} parent=11 // pred_fallthru
          _
        // Predicated region
        $region21: #{tpu_custom_call.1} parent=11 // pred_check
          %p245 = pneg %p154
        $region22: #{tpu_custom_call.1} parent=11 // pred_check_branch
          %247 = sbr.rel (%p245) target = $region24
        $region23: #{tpu_custom_call.1} parent=11 // pred_region
          _
        $region24: #{tpu_custom_call.1} parent=11 // pred_fallthru
          _
        // Predicated region
        $region25: #{tpu_custom_call.1} parent=11 // pred_check
          %p248 = pneg %p175
        $region26: #{tpu_custom_call.1} parent=11 // pred_check_branch
          %250 = sbr.rel (%p248) target = $region28
        $region27: #{tpu_custom_call.1} parent=11 // pred_region
          _
        $region28: #{tpu_custom_call.1} parent=11 // pred_fallthru
          _
        // Predicated region
        $region29: #{tpu_custom_call.1} parent=11 // pred_check
          %p251 = pneg %p196
        $region30: #{tpu_custom_call.1} parent=11 // pred_check_branch
          %253 = sbr.rel (%p251) target = $region32
        $region31: #{tpu_custom_call.1} parent=11 // pred_region
          _
        $region32: #{tpu_custom_call.1} parent=11 // pred_fallthru
          _
      $region12: #{tpu_custom_call.1} parent=5 // pred_fallthru
        _
      %p254 = scmp.lt.s32.totalorder %s23, 2
      // Predicated region
      $region33: #{tpu_custom_call.1} parent=5 // pred_check
        %p255 = pneg %p254
      $region34: #{tpu_custom_call.1} parent=5 // pred_check_branch
        %257 = sbr.rel (%p255) target = $region36
      $region35: #{tpu_custom_call.1} parent=5 // pred_region
        // Predicated region
        $region37: #{tpu_custom_call.1} parent=35 // pred_check
          %p258 = pneg %p57
        $region38: #{tpu_custom_call.1} parent=35 // pred_check_branch
          %260 = sbr.rel (%p258) target = $region40
        $region39: #{tpu_custom_call.1} parent=35 // pred_region
          %s261 = sand.u32 %s47, 1
          %s262 = scalar_lea.sflag [#allocation4], %s261
          %s263 = sand.u32 %s47, 1
          %s264 = smul.addr %s263, 256
          %s265 = scalar_lea.vmem [#allocation3], %s264
          %s266 = smul.u32 4, %s31
          %s268 = ssub.s32 4096, 4096
          %269 = vsyncadd %s262, %s268
          %s270 = smul.addr %s30, 64
          %s271 = sadd.s32 %s266, %s270
          %s272 = smul.addr %s271, 64
          %s273 = scalar_lea.hbm %s0, %s272
          %s274 = sshll.u32 %s265, 4
          %s275 = int_to_ptr.vmem [resolvable:$true] %s274
          %280 = dma.hbm_to_vmem [thread:$0]  %s273, 4096, %s275, %s262, 256, 256, 16
        $region40: #{tpu_custom_call.1} parent=35 // pred_fallthru
          _
        // Predicated region
        $region41: #{tpu_custom_call.1} parent=35 // pred_check
          %p281 = pneg %p85
        $region42: #{tpu_custom_call.1} parent=35 // pred_check_branch
          %283 = sbr.rel (%p281) target = $region44
        $region43: #{tpu_custom_call.1} parent=35 // pred_region
          %s284 = sand.u32 %s75, 1
          %s285 = scalar_lea.sflag [#allocation7], %s284
          %s286 = sand.u32 %s75, 1
          %s287 = smul.addr %s286, 16
          %s288 = scalar_lea.vmem [#allocation6], %s287
          %s289 = smul.u32 4, %s31
          %s291 = ssub.s32 256, 256
          %292 = vsyncadd %s285, %s291
          %s293 = smul.addr %s30, 4
          %s294 = sadd.s32 %s289, %s293
          %s295 = smul.addr %s294, 64
          %s296 = scalar_lea.hbm %s1, %s295
          %s298 = sshll.u32 %s288, 4
          %s299 = int_to_ptr.vmem [resolvable:$true] %s298
          %301 = dma.hbm_to_vmem [thread:$0]  %s296, 256, %s299, %s285
        $region44: #{tpu_custom_call.1} parent=35 // pred_fallthru
          _
      $region36: #{tpu_custom_call.1} parent=5 // pred_fallthru
        _
      %p302 = scmp.le.s32.totalorder 1, %s23
      %p303 = scmp.lt.s32.totalorder %s23, 3
      %p304 = pnand %p302, %p303
      %p305 = pneg %p304
      // Predicated region
      $region45: #{tpu_custom_call.1} parent=5 // pred_check
        _
      $region46: #{tpu_custom_call.1} parent=5 // pred_check_branch
        %307 = sbr.rel (%p304) target = $region48
      $region47: #{tpu_custom_call.1} parent=5 // pred_region
        %s308 = ssub.s32 %s23, 1
        %s309 = sand.u32 %s50, 1
        %s310 = scalar_lea.sflag [#allocation4], %s309
        %s311 = sand.u32 %s50, 1
        %s312 = smul.addr %s311, 256
        %s313 = scalar_lea.vmem [#allocation3], %s312
        // Predicated region
        $region49: #{tpu_custom_call.1} parent=47 // pred_check
          %p314 = pneg %p63
        $region50: #{tpu_custom_call.1} parent=47 // pred_check_branch
          %316 = sbr.rel (%p314) target = $region52
        $region51: #{tpu_custom_call.1} parent=47 // pred_region
          %317 = dma.done %s310, 4096
        $region52: #{tpu_custom_call.1} parent=47 // pred_fallthru
          _
        %s318 = sand.u32 %s78, 1
        %s319 = scalar_lea.sflag [#allocation7], %s318
        %s320 = sand.u32 %s78, 1
        %s321 = smul.addr %s320, 16
        %s322 = scalar_lea.vmem [#allocation6], %s321
        // Predicated region
        $region53: #{tpu_custom_call.1} parent=47 // pred_check
          %p323 = pneg %p91
        $region54: #{tpu_custom_call.1} parent=47 // pred_check_branch
          %325 = sbr.rel (%p323) target = $region56
        $region55: #{tpu_custom_call.1} parent=47 // pred_region
          %326 = dma.done %s319, 256
        $region56: #{tpu_custom_call.1} parent=47 // pred_fallthru
          _
        %s327 = sand.u32 %s50, 1
        %s328 = scalar_lea.sflag [#allocation4], %s327
        %s329 = sand.u32 %s50, 1
        %s330 = smul.addr %s329, 256
        %s331 = scalar_lea.vmem [#allocation3], %s330
        %p332 = pneg %p63
        %p333 = pneg %p60
        %s334 = sand.u32 %s78, 1
        %s335 = scalar_lea.sflag [#allocation7], %s334
        %s336 = sand.u32 %s78, 1
        %s337 = smul.addr %s336, 16
        %s338 = scalar_lea.vmem [#allocation6], %s337
        %p339 = pneg %p91
        %p340 = pneg %p88
        %p341 = pneg %p112
        %p342 = pneg %p109
        %p343 = pneg %p133
        %p344 = pneg %p130
        %p345 = pneg %p154
        %p346 = pneg %p151
        %p347 = pneg %p175
        %p348 = pneg %p172
        %p349 = pneg %p196
        %p350 = pneg %p193
        %p351 = pneg %p224
        %p352 = pneg %p221
        %s353 = sand.u32 %s211, 1
        %s354 = scalar_lea.sflag [#allocation5], %s353
        %s355 = sand.u32 %s211, 1
        %s356 = smul.addr %s355, 16
        %s357 = scalar_lea.vmem [#allocation8], %s356
        %s358 = smul.u32 4, %s33
        %s359 = smul.u32 4, %s33
        %s360 = smul.u32 4, %s33
        %v362 = vld [vmem:[%s322] sm:$0xff]
        %v363 = vld [vmem:[%s322 + $0x8] sm:$0xff]
        %v364 = vld [vmem:[%s2] sm:$0x3]
        %v365 = vld [vmem:[%s313] sm:$0xff]
        %v366 = vld [vmem:[%s313 + $0x8] sm:$0xff]
        %v367 = vld [vmem:[%s313 + $0x10] sm:$0xff]
        %v368 = vld [vmem:[%s313 + $0x18] sm:$0xff]
        %v369 = vld [vmem:[%s313 + $0x20] sm:$0xff]
        %v370 = vld [vmem:[%s313 + $0x28] sm:$0xff]
        %v371 = vld [vmem:[%s313 + $0x30] sm:$0xff]
        %v372 = vld [vmem:[%s313 + $0x38] sm:$0xff]
        %v373 = vld [vmem:[%s313 + $0x40] sm:$0xff]
        %v374 = vld [vmem:[%s313 + $0x48] sm:$0xff]
        %v375 = vld [vmem:[%s313 + $0x50] sm:$0xff]
        %v376 = vld [vmem:[%s313 + $0x58] sm:$0xff]
        %v377 = vld [vmem:[%s313 + $0x60] sm:$0xff]
        %v378 = vld [vmem:[%s313 + $0x68] sm:$0xff]
        %v379 = vld [vmem:[%s313 + $0x70] sm:$0xff]
        %v380 = vld [vmem:[%s313 + $0x78] sm:$0xff]
        %v381 = vld [vmem:[%s313 + $0x80] sm:$0xff]
        %v382 = vld [vmem:[%s313 + $0x88] sm:$0xff]
        %v383 = vld [vmem:[%s313 + $0x90] sm:$0xff]
        %v384 = vld [vmem:[%s313 + $0x98] sm:$0xff]
        %v385 = vld [vmem:[%s313 + $0xa0] sm:$0xff]
        %v386 = vld [vmem:[%s313 + $0xa8] sm:$0xff]
        %v387 = vld [vmem:[%s313 + $0xb0] sm:$0xff]
        %v388 = vld [vmem:[%s313 + $0xb8] sm:$0xff]
        %v389 = vld [vmem:[%s313 + $0xc0] sm:$0xff]
        %v390 = vld [vmem:[%s313 + $0xc8] sm:$0xff]
        %v391 = vld [vmem:[%s313 + $0xd0] sm:$0xff]
        %v392 = vld [vmem:[%s313 + $0xd8] sm:$0xff]
        %v393 = vld [vmem:[%s313 + $0xe0] sm:$0xff]
        %v394 = vld [vmem:[%s313 + $0xe8] sm:$0xff]
        %v395 = vld [vmem:[%s313 + $0xf0] sm:$0xff]
        %v396 = vld [vmem:[%s313 + $0xf8] sm:$0xff]
        %v397 = vld [vmem:[%s3] sm:$0xf]
        %v400 = vcombine.high %v362, %v362
        %v401 = vcombine.high %v363, %v363
        %vm402 = vcmask 31744
        %v404 = vsel %vm402, %v397, 0
        %vm406 = vcmask 1043456
        %v407 = vsel %vm406, %v362, 0
        %v409 = vsel %vm406, %v400, 0
        %v411 = vsel %vm406, %v363, 0
        %v413 = vsel %vm406, %v401, 0
        %415 = vmatprep.subr.mxu0 %v409
        %416 = vmatpush1.msra.mxu0 %v407
        %417 = vmatprep.subr.mxu0 0.0
        %418 = vmatpush1.msra.mxu0 0.0
        %419 = vmatprep.subr.mxu0 0.0
        %420 = vmatpush1.msra.mxu0 0.0
        %421 = vmatprep.subr.mxu0 0.0
        %422 = vmatpush1.msra.mxu0 0.0
        %423 = vmatprep.subr.mxu0 0.0
        %424 = vmatpush1.msra.mxu0 0.0
        %425 = vmatprep.subr.mxu0 0.0
        %426 = vmatpush1.msra.mxu0 0.0
        %427 = vmatprep.subr.mxu0 0.0
        %428 = vmatpush1.msra.mxu0 0.0
        %429 = vmatprep.subr.mxu0 0.0
        %430 = vmatpush1.msra.mxu0 0.0
        %431 = vmatprep.subr.mxu0 0.0
        %432 = vmatpush1.msra.mxu0 0.0
        %433 = vmatprep.subr.mxu0 0.0
        %434 = vmatpush1.msra.mxu0 0.0
        %435 = vmatprep.subr.mxu0 0.0
        %436 = vmatpush1.msra.mxu0 0.0
        %437 = vmatprep.subr.mxu0 0.0
        %438 = vmatpush1.msra.mxu0 0.0
        %439 = vmatprep.subr.mxu0 0.0
        %440 = vmatpush1.msra.mxu0 0.0
        %441 = vmatprep.subr.mxu0 0.0
        %442 = vmatpush1.msra.mxu0 0.0
        %443 = vmatprep.subr.mxu0 0.0
        %444 = vmatpush1.msra.mxu0 0.0
        %445 = vmatprep.subr.mxu0 0.0
        %446 = vmatpush1.msra.mxu0 0.0
        %447 = vmatprep.subr.mxu0 0.0
        %448 = vmatpush1.msra.mxu0 0.0
        %449 = vmatprep.subr.mxu0 0.0
        %450 = vmatpush1.msra.mxu0 0.0
        %451 = vmatprep.subr.mxu0 0.0
        %452 = vmatpush1.msra.mxu0 0.0
        %453 = vmatprep.subr.mxu0 0.0
        %454 = vmatpush1.msra.mxu0 0.0
        %455 = vmatprep.subr.mxu0 0.0
        %456 = vmatpush1.msra.mxu0 0.0
        %457 = vmatprep.subr.mxu0 0.0
        %458 = vmatpush1.msra.mxu0 0.0
        %459 = vmatprep.subr.mxu0 0.0
        %460 = vmatpush1.msra.mxu0 0.0
        %461 = vmatprep.subr.mxu0 0.0
        %462 = vmatpush1.msra.mxu0 0.0
        %463 = vmatprep.subr.mxu0 0.0
        %464 = vmatpush1.msra.mxu0 0.0
        %465 = vmatprep.subr.mxu0 0.0
        %466 = vmatpush1.msra.mxu0 0.0
        %467 = vmatprep.subr.mxu0 0.0
        %468 = vmatpush1.msra.mxu0 0.0
        %469 = vmatprep.subr.mxu0 0.0
        %470 = vmatpush1.msra.mxu0 0.0
        %471 = vmatprep.subr.mxu0 0.0
        %472 = vmatpush1.msra.mxu0 0.0
        %473 = vmatprep.subr.mxu0 0.0
        %474 = vmatpush1.msra.mxu0 0.0
        %475 = vmatprep.subr.mxu0 0.0
        %476 = vmatpush1.msra.mxu0 0.0
        %477 = vmatprep.subr.mxu0 0.0
        %478 = vmatpush1.msra.mxu0 0.0
        %479 = vmatprep.mubr.f32.mxu0 0.0
        %480 = vmatmul.mubr.f32.gmra.mrb[0].mxu0 %v404
        %v481 = vpop.f32.mrb[0].mxu0
        %v482 = vadd.f32 0.0, %v481
        %v483 = vpop.f32.mrb[0].mxu0
        %v484 = vadd.f32 0.0, %v483
        %485 = vdwg.mxu0
        %486 = vmatprep.subr.mxu0 %v413
        %487 = vmatpush1.msra.mxu0 %v411
        %488 = vmatprep.subr.mxu0 0.0
        %489 = vmatpush1.msra.mxu0 0.0
        %490 = vmatprep.subr.mxu0 0.0
        %491 = vmatpush1.msra.mxu0 0.0
        %492 = vmatprep.subr.mxu0 0.0
        %493 = vmatpush1.msra.mxu0 0.0
        %494 = vmatprep.subr.mxu0 0.0
        %495 = vmatpush1.msra.mxu0 0.0
        %496 = vmatprep.subr.mxu0 0.0
        %497 = vmatpush1.msra.mxu0 0.0
        %498 = vmatprep.subr.mxu0 0.0
        %499 = vmatpush1.msra.mxu0 0.0
        %500 = vmatprep.subr.mxu0 0.0
        %501 = vmatpush1.msra.mxu0 0.0
        %502 = vmatprep.subr.mxu0 0.0
        %503 = vmatpush1.msra.mxu0 0.0
        %504 = vmatprep.subr.mxu0 0.0
        %505 = vmatpush1.msra.mxu0 0.0
        %506 = vmatprep.subr.mxu0 0.0
        %507 = vmatpush1.msra.mxu0 0.0
        %508 = vmatprep.subr.mxu0 0.0
        %509 = vmatpush1.msra.mxu0 0.0
        %510 = vmatprep.subr.mxu0 0.0
        %511 = vmatpush1.msra.mxu0 0.0
        %512 = vmatprep.subr.mxu0 0.0
        %513 = vmatpush1.msra.mxu0 0.0
        %514 = vmatprep.subr.mxu0 0.0
        %515 = vmatpush1.msra.mxu0 0.0
        %516 = vmatprep.subr.mxu0 0.0
        %517 = vmatpush1.msra.mxu0 0.0
        %518 = vmatprep.subr.mxu0 0.0
        %519 = vmatpush1.msra.mxu0 0.0
        %520 = vmatprep.subr.mxu0 0.0
        %521 = vmatpush1.msra.mxu0 0.0
        %522 = vmatprep.subr.mxu0 0.0
        %523 = vmatpush1.msra.mxu0 0.0
        %524 = vmatprep.subr.mxu0 0.0
        %525 = vmatpush1.msra.mxu0 0.0
        %526 = vmatprep.subr.mxu0 0.0
        %527 = vmatpush1.msra.mxu0 0.0
        %528 = vmatprep.subr.mxu0 0.0
        %529 = vmatpush1.msra.mxu0 0.0
        %530 = vmatprep.subr.mxu0 0.0
        %531 = vmatpush1.msra.mxu0 0.0
        %532 = vmatprep.subr.mxu0 0.0
        %533 = vmatpush1.msra.mxu0 0.0
        %534 = vmatprep.subr.mxu0 0.0
        %535 = vmatpush1.msra.mxu0 0.0
        %536 = vmatprep.subr.mxu0 0.0
        %537 = vmatpush1.msra.mxu0 0.0
        %538 = vmatprep.subr.mxu0 0.0
        %539 = vmatpush1.msra.mxu0 0.0
        %540 = vmatprep.subr.mxu0 0.0
        %541 = vmatpush1.msra.mxu0 0.0
        %542 = vmatprep.subr.mxu0 0.0
        %543 = vmatpush1.msra.mxu0 0.0
        %544 = vmatprep.subr.mxu0 0.0
        %545 = vmatpush1.msra.mxu0 0.0
        %546 = vmatprep.subr.mxu0 0.0
        %547 = vmatpush1.msra.mxu0 0.0
        %548 = vmatprep.subr.mxu0 0.0
        %549 = vmatpush1.msra.mxu0 0.0
        %550 = vmatprep.mubr.f32.mxu0 0.0
        %551 = vmatmul.mubr.f32.gmra.mrb[0].mxu0 %v404
        %v552 = vpop.f32.mrb[0].mxu0
        %v553 = vadd.f32 0.0, %v552
        %v554 = vpop.f32.mrb[0].mxu0
        %v555 = vadd.f32 0.0, %v554
        %556 = vdwg.mxu0
        %v589 = vunpack.c.l.b16 %v365
        %v590 = vunpack.c.h.b16 %v365
        %v591 = vunpack.c.l.b16 %v366
        %v592 = vunpack.c.h.b16 %v366
        %v593 = vunpack.c.l.b16 %v367
        %v594 = vunpack.c.h.b16 %v367
        %v595 = vunpack.c.l.b16 %v368
        %v596 = vunpack.c.h.b16 %v368
        %v597 = vunpack.c.l.b16 %v369
        %v598 = vunpack.c.h.b16 %v369
        %v599 = vunpack.c.l.b16 %v370
        %v600 = vunpack.c.h.b16 %v370
        %v601 = vunpack.c.l.b16 %v371
        %v602 = vunpack.c.h.b16 %v371
        %v603 = vunpack.c.l.b16 %v372
        %v604 = vunpack.c.h.b16 %v372
        %v605 = vunpack.c.l.b16 %v373
        %v606 = vunpack.c.h.b16 %v373
        %v607 = vunpack.c.l.b16 %v374
        %v608 = vunpack.c.h.b16 %v374
        %v609 = vunpack.c.l.b16 %v375
        %v610 = vunpack.c.h.b16 %v375
        %v611 = vunpack.c.l.b16 %v376
        %v612 = vunpack.c.h.b16 %v376
        %v613 = vunpack.c.l.b16 %v377
        %v614 = vunpack.c.h.b16 %v377
        %v615 = vunpack.c.l.b16 %v378
        %v616 = vunpack.c.h.b16 %v378
        %v617 = vunpack.c.l.b16 %v379
        %v618 = vunpack.c.h.b16 %v379
        %v619 = vunpack.c.l.b16 %v380
        %v620 = vunpack.c.h.b16 %v380
        %v621 = vunpack.c.l.b16 %v381
        %v622 = vunpack.c.h.b16 %v381
        %v623 = vunpack.c.l.b16 %v382
        %v624 = vunpack.c.h.b16 %v382
        %v625 = vunpack.c.l.b16 %v383
        %v626 = vunpack.c.h.b16 %v383
        %v627 = vunpack.c.l.b16 %v384
        %v628 = vunpack.c.h.b16 %v384
        %v629 = vunpack.c.l.b16 %v385
        %v630 = vunpack.c.h.b16 %v385
        %v631 = vunpack.c.l.b16 %v386
        %v632 = vunpack.c.h.b16 %v386
        %v633 = vunpack.c.l.b16 %v387
        %v634 = vunpack.c.h.b16 %v387
        %v635 = vunpack.c.l.b16 %v388
        %v636 = vunpack.c.h.b16 %v388
        %v637 = vunpack.c.l.b16 %v389
        %v638 = vunpack.c.h.b16 %v389
        %v639 = vunpack.c.l.b16 %v390
        %v640 = vunpack.c.h.b16 %v390
        %v641 = vunpack.c.l.b16 %v391
        %v642 = vunpack.c.h.b16 %v391
        %v643 = vunpack.c.l.b16 %v392
        %v644 = vunpack.c.h.b16 %v392
        %v645 = vunpack.c.l.b16 %v393
        %v646 = vunpack.c.h.b16 %v393
        %v647 = vunpack.c.l.b16 %v394
        %v648 = vunpack.c.h.b16 %v394
        %v649 = vunpack.c.l.b16 %v395
        %v650 = vunpack.c.h.b16 %v395
        %v651 = vunpack.c.l.b16 %v396
        %v652 = vunpack.c.h.b16 %v396
        %v653 = vpack.c.b16 %v593, %v589
        %v654 = vpack.c.b16 %v594, %v590
        %v655 = vpack.c.b16 %v595, %v591
        %v656 = vpack.c.b16 %v596, %v592
        %v657 = vpack.c.b16 %v601, %v597
        %v658 = vpack.c.b16 %v602, %v598
        %v659 = vpack.c.b16 %v603, %v599
        %v660 = vpack.c.b16 %v604, %v600
        %v661 = vpack.c.b16 %v609, %v605
        %v662 = vpack.c.b16 %v610, %v606
        %v663 = vpack.c.b16 %v611, %v607
        %v664 = vpack.c.b16 %v612, %v608
        %v665 = vpack.c.b16 %v617, %v613
        %v666 = vpack.c.b16 %v618, %v614
        %v667 = vpack.c.b16 %v619, %v615
        %v668 = vpack.c.b16 %v620, %v616
        %v669 = vpack.c.b16 %v625, %v621
        %v670 = vpack.c.b16 %v626, %v622
        %v671 = vpack.c.b16 %v627, %v623
        %v672 = vpack.c.b16 %v628, %v624
        %v673 = vpack.c.b16 %v633, %v629
        %v674 = vpack.c.b16 %v634, %v630
        %v675 = vpack.c.b16 %v635, %v631
        %v676 = vpack.c.b16 %v636, %v632
        %v677 = vpack.c.b16 %v641, %v637
        %v678 = vpack.c.b16 %v642, %v638
        %v679 = vpack.c.b16 %v643, %v639
        %v680 = vpack.c.b16 %v644, %v640
        %v681 = vpack.c.b16 %v649, %v645
        %v682 = vpack.c.b16 %v650, %v646
        %v683 = vpack.c.b16 %v651, %v647
        %v684 = vpack.c.b16 %v652, %v648
        %717 = vmatprep.subr.bf16.mxu0 %v654
        %718 = vmatpush1.bf16.msra.mxu0 %v653
        %719 = vmatprep.subr.bf16.mxu0 %v658
        %720 = vmatpush1.bf16.msra.mxu0 %v657
        %721 = vmatprep.subr.bf16.mxu0 %v662
        %722 = vmatpush1.bf16.msra.mxu0 %v661
        %723 = vmatprep.subr.bf16.mxu0 %v666
        %724 = vmatpush1.bf16.msra.mxu0 %v665
        %725 = vmatprep.subr.bf16.mxu0 %v670
        %726 = vmatpush1.bf16.msra.mxu0 %v669
        %727 = vmatprep.subr.bf16.mxu0 %v674
        %728 = vmatpush1.bf16.msra.mxu0 %v673
        %729 = vmatprep.subr.bf16.mxu0 %v678
        %730 = vmatpush1.bf16.msra.mxu0 %v677
        %731 = vmatprep.subr.bf16.mxu0 %v682
        %732 = vmatpush1.bf16.msra.mxu0 %v681
        %733 = vmatprep.subr.bf16.mxu0 0
        %734 = vmatpush1.bf16.msra.mxu0 0
        %735 = vmatprep.subr.bf16.mxu0 0
        %736 = vmatpush1.bf16.msra.mxu0 0
        %737 = vmatprep.subr.bf16.mxu0 0
        %738 = vmatpush1.bf16.msra.mxu0 0
        %739 = vmatprep.subr.bf16.mxu0 0
        %740 = vmatpush1.bf16.msra.mxu0 0
        %741 = vmatprep.subr.bf16.mxu0 0
        %742 = vmatpush1.bf16.msra.mxu0 0
        %743 = vmatprep.subr.bf16.mxu0 0
        %744 = vmatpush1.bf16.msra.mxu0 0
        %745 = vmatprep.subr.bf16.mxu0 0
        %746 = vmatpush1.bf16.msra.mxu0 0
        %747 = vmatprep.subr.bf16.mxu0 0
        %748 = vmatpush1.bf16.msra.mxu0 0
        %749 = vmatprep.mubr.bf16.mxu0 0
        %750 = vmatmul.mubr.bf16.gmra.mrb[0].mxu0 %v364
        %v751 = vpop.f32.mrb[0].mxu0
        %v752 = vadd.f32 %v482, %v751
        %v753 = vpop.f32.mrb[0].mxu0
        %v754 = vadd.f32 %v484, %v753
        %v755 = vpop.f32.mrb[0].mxu0
        %v756 = vpop.f32.mrb[0].mxu0
        %757 = vdwg.mxu0
        %758 = vmatprep.subr.bf16.mxu0 %v656
        %759 = vmatpush1.bf16.msra.mxu0 %v655
        %760 = vmatprep.subr.bf16.mxu0 %v660
        %761 = vmatpush1.bf16.msra.mxu0 %v659
        %762 = vmatprep.subr.bf16.mxu0 %v664
        %763 = vmatpush1.bf16.msra.mxu0 %v663
        %764 = vmatprep.subr.bf16.mxu0 %v668
        %765 = vmatpush1.bf16.msra.mxu0 %v667
        %766 = vmatprep.subr.bf16.mxu0 %v672
        %767 = vmatpush1.bf16.msra.mxu0 %v671
        %768 = vmatprep.subr.bf16.mxu0 %v676
        %769 = vmatpush1.bf16.msra.mxu0 %v675
        %770 = vmatprep.subr.bf16.mxu0 %v680
        %771 = vmatpush1.bf16.msra.mxu0 %v679
        %772 = vmatprep.subr.bf16.mxu0 %v684
        %773 = vmatpush1.bf16.msra.mxu0 %v683
        %774 = vmatprep.subr.bf16.mxu0 0
        %775 = vmatpush1.bf16.msra.mxu0 0
        %776 = vmatprep.subr.bf16.mxu0 0
        %777 = vmatpush1.bf16.msra.mxu0 0
        %778 = vmatprep.subr.bf16.mxu0 0
        %779 = vmatpush1.bf16.msra.mxu0 0
        %780 = vmatprep.subr.bf16.mxu0 0
        %781 = vmatpush1.bf16.msra.mxu0 0
        %782 = vmatprep.subr.bf16.mxu0 0
        %783 = vmatpush1.bf16.msra.mxu0 0
        %784 = vmatprep.subr.bf16.mxu0 0
        %785 = vmatpush1.bf16.msra.mxu0 0
        %786 = vmatprep.subr.bf16.mxu0 0
        %787 = vmatpush1.bf16.msra.mxu0 0
        %788 = vmatprep.subr.bf16.mxu0 0
        %789 = vmatpush1.bf16.msra.mxu0 0
        %790 = vmatprep.mubr.bf16.mxu0 0
        %791 = vmatmul.mubr.bf16.gmra.mrb[0].mxu0 %v364
        %v792 = vpop.f32.mrb[0].mxu0
        %v793 = vadd.f32 %v553, %v792
        %v794 = vpop.f32.mrb[0].mxu0
        %v795 = vadd.f32 %v555, %v794
        %v796 = vpop.f32.mrb[0].mxu0
        %v797 = vpop.f32.mrb[0].mxu0
        %798 = vdwg.mxu0
        %v799 = vld [vmem:[%s4] sm:$0xf]
        %801 = vset.pattern.permute.xlu0 0
        %802 = vperm.xlu0 %801, %v799
        %v803 = vpop.permute.xlu0 %802
        %v805 = vadd.f32 %v752, %v803
        %v806 = vadd.f32 %v754, %v803
        %v807 = vadd.f32 %v793, %v803
        %v808 = vadd.f32 %v795, %v803
        %v809 = vmax.f32 %v805, 0.0
        %v810 = vmax.f32 %v806, 0.0
        %v811 = vmax.f32 %v807, 0.0
        %v812 = vmax.f32 %v808, 0.0
        %v813 = vld [vmem:[%s5] sm:$0xf]
        %815 = vset.pattern.permute.xlu0 0
        %816 = vperm.xlu0 %815, %v813
        %v817 = vpop.permute.xlu0 %816
        %v819 = vmul.f32 %v809, %v817
        %v820 = vmul.f32 %v810, %v817
        %v821 = vmul.f32 %v811, %v817
        %v822 = vmul.f32 %v812, %v817
        %v823 = vsel %vm406, %v819, 0.0
        %v824 = vrot.slane %v823, 4
        %v825 = vadd.f32 %v823, %v824
        %v826 = vrot.slane %v825, 2
        %v827 = vadd.f32 %v825, %v826
        %v828 = vrot.slane %v827, 1
        %v829 = vadd.f32 %v827, %v828
        %v830 = vsel %vm406, %v820, 0.0
        %v831 = vrot.slane %v830, 4
        %v832 = vadd.f32 %v830, %v831
        %v833 = vrot.slane %v832, 2
        %v834 = vadd.f32 %v832, %v833
        %v835 = vrot.slane %v834, 1
        %v836 = vadd.f32 %v834, %v835
        %v837 = vsel %vm406, %v821, 0.0
        %v838 = vrot.slane %v837, 4
        %v839 = vadd.f32 %v837, %v838
        %v840 = vrot.slane %v839, 2
        %v841 = vadd.f32 %v839, %v840
        %v842 = vrot.slane %v841, 1
        %v843 = vadd.f32 %v841, %v842
        %v844 = vsel %vm406, %v822, 0.0
        %v845 = vrot.slane %v844, 4
        %v846 = vadd.f32 %v844, %v845
        %v847 = vrot.slane %v846, 2
        %v848 = vadd.f32 %v846, %v847
        %v849 = vrot.slane %v848, 1
        %v850 = vadd.f32 %v848, %v849
        %s851 = sld [smem:[#allocation2]]
        %v852 = vstv %s851
        %v853 = vadd.f32 %v829, %v852
        %v854 = vadd.f32 %v836, %v852
        %v855 = vadd.f32 %v843, %v852
        %v856 = vadd.f32 %v850, %v852
        %v857 = vsub.f32 0.0, %v853
        %v858 = vsub.f32 0.0, %v854
        %v859 = vsub.f32 0.0, %v855
        %v860 = vsub.f32 0.0, %v856
        %v861 = vmul.f32 %v857, 1.442695
        %v862 = vpow.pop %v861
        %v863 = vmul.f32 %v858, 1.442695
        %v864 = vpow.pop %v863
        %v865 = vmul.f32 %v859, 1.442695
        %v866 = vpow.pop %v865
        %v867 = vmul.f32 %v860, 1.442695
        %v868 = vpow.pop %v867
        %v869 = vadd.f32 %v862, 1.0
        %v870 = vadd.f32 %v864, 1.0
        %v871 = vadd.f32 %v866, 1.0
        %v872 = vadd.f32 %v868, 1.0
        %v873 = vrcp.pop %v869
        %v874 = vrcp.pop %v870
        %v875 = vrcp.pop %v871
        %v876 = vrcp.pop %v872
        %v881 = vcombine.low %v873, %v874
        %v882 = vcombine.low %v875, %v876
        %v885 = vmul.f32 %v362, %v881
        %v886 = vmul.f32 %v363, %v882
        %887 = vst [vmem:[%s357] sm:$0xff] %v885
        %888 = vst [vmem:[%s357 + $0x8] sm:$0xff] %v886
        %s889 = sand.u32 %s211, 1
        %s890 = scalar_lea.sflag [#allocation5], %s889
        %s891 = sand.u32 %s211, 1
        %s892 = smul.addr %s891, 16
        %s893 = scalar_lea.vmem [#allocation8], %s892
        // Predicated region
        $region57: #{tpu_custom_call.1} parent=47 // pred_check
          %p894 = pneg %p221
        $region58: #{tpu_custom_call.1} parent=47 // pred_check_branch
          %896 = sbr.rel (%p894) target = $region60
        $region59: #{tpu_custom_call.1} parent=47 // pred_region
          %s897 = smul.u32 4, %s33
          %s899 = ssub.s32 256, 256
          %900 = vsyncadd %s890, %s899
          %s901 = smul.addr %s32, 4
          %s902 = sadd.s32 %s897, %s901
          %s903 = smul.addr %s902, 64
          %s904 = scalar_lea.hbm %s7, %s903
          %s906 = sshll.u32 %s893, 4
          %s907 = int_to_ptr.vmem [resolvable:$true] %s906
          %909 = dma.vmem_to_hbm [thread:$0]  %s907, 256, %s904, %s890
        $region60: #{tpu_custom_call.1} parent=47 // pred_fallthru
          _
      $region48: #{tpu_custom_call.1} parent=5 // pred_fallthru
        _
      %p910 = scmp.le.s32.totalorder 2, %s23
      // Predicated region
      $region61: #{tpu_custom_call.1} parent=5 // pred_check
        %p911 = pneg %p910
      $region62: #{tpu_custom_call.1} parent=5 // pred_check_branch
        %913 = sbr.rel (%p911) target = $region64
      $region63: #{tpu_custom_call.1} parent=5 // pred_region
        %s914 = ssub.s32 %s23, 2
        // Predicated region
        $region65: #{tpu_custom_call.1} parent=63 // pred_check
          %p915 = pneg %p227
        $region66: #{tpu_custom_call.1} parent=63 // pred_check_branch
          %917 = sbr.rel (%p915) target = $region68
        $region67: #{tpu_custom_call.1} parent=63 // pred_region
          %s918 = sand.u32 %s212, 1
          %s919 = scalar_lea.sflag [#allocation5], %s918
          %s920 = sand.u32 %s212, 1
          %s921 = smul.addr %s920, 16
          %s922 = scalar_lea.vmem [#allocation8], %s921
          %923 = dma.done %s919, 256
        $region68: #{tpu_custom_call.1} parent=63 // pred_fallthru
          _
      $region64: #{tpu_custom_call.1} parent=5 // pred_fallthru
        _
    $region6: #{tpu_custom_call.1} parent=1 // loop_footer
      %s27 = sadd.s32 1, %s23
    $region7: #{tpu_custom_call.1} parent=1 // loop_footer_branch
      %22 = sbr.rel target = $region3
    $region8: #{tpu_custom_call.1} parent=1 // loop_exit
      _
    %924 = vsyncpa [#allocation4], 1
    %s925 = scalar_lea.sflag [#allocation4], 1
    %926 = vsyncpa %s925, 1
    %927 = vsyncpa [#allocation7], 1
    %s928 = scalar_lea.sflag [#allocation7], 1
    %929 = vsyncpa %s928, 1
    %930 = vsyncpa [#allocation5], 1
    %s931 = scalar_lea.sflag [#allocation5], 1
    %932 = vsyncpa %s931, 1

</llo_original>
